<compile_context>
chip_gen: v7x
topology: tpu7x:2x2x1
jax: 0.10.0
libtpu: 0.0.40
codegen_flags: <defaults>
</compile_context>

<pallas_src>
import jax
import jax.numpy as jnp
from jax.experimental import pallas as pl
from jax.experimental.pallas import tpu as pltpu

IN_F = 44
HID = 64
BN_EPS = 1e-5
DEFAULT_TB = 8192  # batch tile (multiple of 8); sweepable


def nn_kernel(x_ref, w_ref, b_ref, out_ref):
    # Entire eval-mode network folded to one affine map: (TB,44)@(44,Q) + (1,Q)
    out_ref[...] = (
        jnp.dot(x_ref[...], w_ref[...], preferred_element_type=jnp.float32)
        + b_ref[...]
    )


def _round_up(n, m):
    return ((n + m - 1) // m) * m


def nn_forward(x, params, *, tb=DEFAULT_TB):
    """x: (B, 44) f32.  Returns list of (B, 1) arrays, one per quantile head."""
    w1, b1, gamma, beta, mean, var, w2, b2 = params
    B = x.shape[0]
    Q = w2.shape[1]

    # ---- Fold eval-mode BN + both linears into a single affine map (host, once) ----
    scale = gamma * jax.lax.rsqrt(var + BN_EPS)                  # (1, 64)
    w1f = w1 * scale                                             # (44, 64)
    b1f = (b1 - mean) * scale + beta                             # (1, 64)
    w_eff = (w1f @ w2).astype(jnp.float32)                       # (44, Q)
    b_eff = (b1f @ w2 + b2).astype(jnp.float32)                  # (1, Q)

    # ---- Batch tiling: clamp tile for small batches, pad B up to a tile multiple ----
    tb = max(8, min(tb, _round_up(B, 8)))
    Bp = _round_up(B, tb)
    if Bp != B:
        x = jnp.pad(x, ((0, Bp - B), (0, 0)))

    grid = (pl.cdiv(Bp, tb),)

    rep = lambda shape: pl.BlockSpec(shape, lambda i: (0,) * len(shape))

    out = pl.pallas_call(
        nn_kernel,
        out_shape=jax.ShapeDtypeStruct((Bp, Q), jnp.float32),
        grid=grid,
        in_specs=[
            pl.BlockSpec((tb, IN_F), lambda i: (i, 0)),          # x tile   (TB, 44)
            rep(w_eff.shape),                                    # w_eff    (44, Q)
            rep(b_eff.shape),                                    # b_eff    (1, Q)
        ],
        out_specs=pl.BlockSpec((tb, Q), lambda i: (i, 0)),
        compiler_params=pltpu.CompilerParams(
            dimension_semantics=("parallel",),                   # megacore shard on v7x
            vmem_limit_bytes=32 * 1024 * 1024,                   # above v5e's 16 MiB default
        ),
    )(x, w_eff, b_eff)

    out = out[:B]
    # Match the PyTorch module's return type: list of (B, 1) tensors (single split).
    return jnp.split(out, Q, axis=1)


def init_params(key, num_quantiles):
    """Deterministic parameter init mirroring the PyTorch module's shapes."""
    k1, k2, k3, k4 = jax.random.split(key, 4)
    bound1 = 1.0 / (IN_F ** 0.5)
    w1 = jax.random.uniform(k1, (IN_F, HID), jnp.float32, -bound1, bound1)
    b1 = jax.random.uniform(k2, (1, HID), jnp.float32, -bound1, bound1)
    # BatchNorm1d(64) defaults: weight=1, bias=0, running_mean=0, running_var=1
    gamma = jnp.ones((1, HID), jnp.float32)
    beta = jnp.zeros((1, HID), jnp.float32)
    mean = jnp.zeros((1, HID), jnp.float32)
    var = jnp.ones((1, HID), jnp.float32)
    bound2 = 1.0 / (HID ** 0.5)
    w2 = jax.random.uniform(k3, (HID, num_quantiles), jnp.float32, -bound2, bound2)
    b2 = jax.random.uniform(k4, (1, num_quantiles), jnp.float32, -bound2, bound2)
    return (w1, b1, gamma, beta, mean, var, w2, b2)


if __name__ == "__main__":
    quantiles = (0.1, 0.5, 0.9)          # 3 quantile heads
    B = 8                                # small demo batch

    key = jax.random.PRNGKey(0)
    kx, kp = jax.random.split(key)
    x = jax.random.normal(kx, (B, IN_F), jnp.float32)
    # Perturb BN stats so the folding path is actually exercised.
    params = list(init_params(kp, len(quantiles)))
    km, kv = jax.random.split(jax.random.PRNGKey(1))
    params[4] = 0.1 * jax.random.normal(km, (1, HID), jnp.float32)            # running_mean
    params[5] = 1.0 + 0.05 * jax.random.uniform(kv, (1, HID), jnp.float32)    # running_var
    params = tuple(params)

    outs = nn_forward(x, params)
    outs = [jax.block_until_ready(o) for o in outs]

    # Pure-JAX reference (unfolded eval-mode forward)
    w1, b1, gamma, beta, mean, var, w2, b2 = params
    z = x @ w1 + b1
    z = (z - mean) * jax.lax.rsqrt(var + BN_EPS) * gamma + beta
    ref = z @ w2 + b2
    for i, o in enumerate(outs):
        assert o.shape == (B, 1), o.shape
        assert jnp.allclose(o[:, 0], ref[:, i], atol=1e-4, rtol=1e-4)

    # Also exercise a batch that is NOT a multiple of the tile, with multiple tiles.
    B2 = 2500
    x2 = jax.random.normal(jax.random.PRNGKey(2), (B2, IN_F), jnp.float32)
    outs2 = nn_forward(x2, params, tb=1024)
    outs2 = [jax.block_until_ready(o) for o in outs2]
    z2 = (x2 @ w1 + b1 - mean) * jax.lax.rsqrt(var + BN_EPS) * gamma + beta
    ref2 = z2 @ w2 + b2
    for i, o in enumerate(outs2):
        assert o.shape == (B2, 1), o.shape
        assert jnp.allclose(o[:, 0], ref2[:, i], atol=1e-4, rtol=1e-4)

    print("KERNEL_OK")
</pallas_src>

<mosaic_0001>
module attributes {stable_mosaic.version = 11 : i64} {
  func.func @nn_kernel(%arg0: i32, %arg1: memref<8x44xf32, #tpu.memory_space<vmem>>, %arg2: memref<44x3xf32, #tpu.memory_space<vmem>>, %arg3: memref<1x3xf32, #tpu.memory_space<vmem>>, %arg4: memref<8x3xf32, #tpu.memory_space<vmem>>) attributes {dimension_semantics = [#tpu.dimension_semantics<parallel>], iteration_bounds = array<i64: 1>, scalar_prefetch = 0 : i64, scratch_operands = 0 : i64, tpu.core_type = #tpu.core_type<tc>, window_params = [{transform_indices = @transform_0, window_bounds = array<i64: 8, 44>}, {pipeline_mode = #tpu.pipeline_mode<synchronous>, transform_indices = @transform_1, window_bounds = array<i64: 44, 3>}, {pipeline_mode = #tpu.pipeline_mode<synchronous>, transform_indices = @transform_2, window_bounds = array<i64: 1, 3>}, {transform_indices = @transform_3, window_bounds = array<i64: 8, 3>}]} {
    %c0 = arith.constant 0 : index
    %c0_0 = arith.constant 0 : index
    %0 = vector.load %arg1[%c0, %c0_0] : memref<8x44xf32, #tpu.memory_space<vmem>>, vector<8x44xf32>
    %c0_1 = arith.constant 0 : index
    %c0_2 = arith.constant 0 : index
    %1 = vector.load %arg2[%c0_1, %c0_2] : memref<44x3xf32, #tpu.memory_space<vmem>>, vector<44x3xf32>
    %cst = arith.constant dense<0.000000e+00> : vector<8x3xf32>
    %2 = tpu.matmul %0, %1, %cst {dimension_numbers = #tpu.dot_dimension_numbers<[1], [0], [0], [1], [0, 0, 1, 1], [], []>} : vector<8x44xf32>, vector<44x3xf32>, vector<8x3xf32> -> vector<8x3xf32>
    %c0_3 = arith.constant 0 : index
    %c0_4 = arith.constant 0 : index
    %3 = vector.load %arg3[%c0_3, %c0_4] : memref<1x3xf32, #tpu.memory_space<vmem>>, vector<1x3xf32>
    %4 = vector.broadcast %3 : vector<1x3xf32> to vector<8x3xf32>
    %5 = arith.addf %2, %4 : vector<8x3xf32>
    %c0_5 = arith.constant 0 : index
    %c0_6 = arith.constant 0 : index
    %6 = vector.load %arg4[%c0_5, %c0_6] : memref<8x3xf32, #tpu.memory_space<vmem>>, vector<8x3xf32>
    tpu.vector_store %arg4[%c0_5, %c0_6], %5 {strides = array<i32>} : memref<8x3xf32, #tpu.memory_space<vmem>>, vector<8x3xf32>,
    return
  }
  func.func @transform_0(%arg0: i32) -> (i32, i32) {
    %c0_i32 = arith.constant 0 : i32
    %c0_i32_0 = arith.constant 0 : i32
    return %arg0, %c0_i32 : i32, i32
  }
  func.func @transform_1(%arg0: i32) -> (i32, i32) {
    %c0_i32 = arith.constant 0 : i32
    %c0_i32_0 = arith.constant 0 : i32
    %c0_i32_1 = arith.constant 0 : i32
    return %c0_i32, %c0_i32_0 : i32, i32
  }
  func.func @transform_2(%arg0: i32) -> (i32, i32) {
    %c0_i32 = arith.constant 0 : i32
    %c0_i32_0 = arith.constant 0 : i32
    %c0_i32_1 = arith.constant 0 : i32
    return %c0_i32, %c0_i32_0 : i32, i32
  }
  func.func @transform_3(%arg0: i32) -> (i32, i32) {
    %c0_i32 = arith.constant 0 : i32
    %c0_i32_0 = arith.constant 0 : i32
    return %arg0, %c0_i32 : i32, i32
  }
}

</mosaic_0001>

<llo_original>
// kernel: tpu_custom_call.1
$region0: #{tpu_custom_call.1}
  #allocation0 [shape = 'u32[]', space=smem, size = 0x4, offset = 0x4, fixed_abs, tag = 'smem constant byte address 0x4 - core index']
  #allocation1 [shape = 'u32[144,128]{1,0:T(1,128)}', space=vmem, size = 0x12000, scoped, tag = 'internal scratch']
  %s0 = inlined_call_operand.vmem [shape: f32[8,44], index: 0, kind: input, shape index: {}]
  %s1 = inlined_call_operand.vmem [shape: f32[44,3], index: 1, kind: input, shape index: {}]
  %s2 = inlined_call_operand.vmem [shape: f32[1,3], index: 2, kind: input, shape index: {}]
  %s3 = inlined_call_operand.vmem [shape: f32[8,3], index: 3, kind: output, shape index: {}]
  %s4 = sld [smem:[#allocation0]]
  $region22: #{tpu_custom_call.1} parent=0
    _
  %s6 = ssub.s32 1, %s4
  %s7 = scalar_select 0, %s6, %s4
  // Predicated region
  $region2: #{tpu_custom_call.1} parent=0 // pred_check
    _
  $region3: #{tpu_custom_call.1} parent=0 // pred_check_branch
    %9 = sbr.rel (0) target = $region5
  $region4: #{tpu_custom_call.1} parent=0 // pred_region
    _
  $region5: #{tpu_custom_call.1} parent=0 // pred_fallthru
    _
  // Predicated region
  $region6: #{tpu_custom_call.1} parent=0 // pred_check
    _
  $region7: #{tpu_custom_call.1} parent=0 // pred_check_branch
    %11 = sbr.rel (0) target = $region9
  $region8: #{tpu_custom_call.1} parent=0 // pred_region
    _
  $region9: #{tpu_custom_call.1} parent=0 // pred_fallthru
    _
  // Predicated region
  $region10: #{tpu_custom_call.1} parent=0 // pred_check
    _
  $region11: #{tpu_custom_call.1} parent=0 // pred_check_branch
    %13 = sbr.rel (0) target = $region13
  $region12: #{tpu_custom_call.1} parent=0 // pred_region
    _
  $region13: #{tpu_custom_call.1} parent=0 // pred_fallthru
    _
  %v14 = vld [vmem:[%s0] sm:$0xff]
  %v15 = vld [vmem:[%s1] sm:$0xff]
  %v16 = vld [vmem:[%s1 + $0x8] sm:$0xff]
  %v17 = vld [vmem:[%s1 + $0x10] sm:$0xff]
  %v18 = vld [vmem:[%s1 + $0x18] sm:$0xff]
  %v19 = vld [vmem:[%s1 + $0x20] sm:$0xff]
  %v20 = vld [vmem:[%s1 + $0x28] sm:$0xf]
  %v21 = vld [vmem:[%s2] sm:$0x1]
  %v23 = vlaneseq
  %v24 = vshrl.u32 %v23, 7
  %v25 = vsub.s32 0, %v24
  %v26 = vrot.slane %v21, %v25
  %vm28 = vcmask 359424
  %v30 = vsel %vm28, %v14, 0
  %vm32 = vcmask 1043456
  %v34 = vsel %vm32, %v20, 0
  %36 = vmatprep.subr.mxu0 0.0
  %37 = vmatpush1.msra.mxu0 %v15
  %38 = vmatprep.subr.mxu0 0.0
  %39 = vmatpush1.msra.mxu0 %v16
  %40 = vmatprep.subr.mxu0 0.0
  %41 = vmatpush1.msra.mxu0 %v17
  %42 = vmatprep.subr.mxu0 0.0
  %43 = vmatpush1.msra.mxu0 %v18
  %44 = vmatprep.subr.mxu0 0.0
  %45 = vmatpush1.msra.mxu0 %v19
  %46 = vmatprep.subr.mxu0 0.0
  %47 = vmatpush1.msra.mxu0 %v34
  %48 = vmatprep.subr.mxu0 0.0
  %49 = vmatpush1.msra.mxu0 0.0
  %50 = vmatprep.subr.mxu0 0.0
  %51 = vmatpush1.msra.mxu0 0.0
  %52 = vmatprep.subr.mxu0 0.0
  %53 = vmatpush1.msra.mxu0 0.0
  %54 = vmatprep.subr.mxu0 0.0
  %55 = vmatpush1.msra.mxu0 0.0
  %56 = vmatprep.subr.mxu0 0.0
  %57 = vmatpush1.msra.mxu0 0.0
  %58 = vmatprep.subr.mxu0 0.0
  %59 = vmatpush1.msra.mxu0 0.0
  %60 = vmatprep.subr.mxu0 0.0
  %61 = vmatpush1.msra.mxu0 0.0
  %62 = vmatprep.subr.mxu0 0.0
  %63 = vmatpush1.msra.mxu0 0.0
  %64 = vmatprep.subr.mxu0 0.0
  %65 = vmatpush1.msra.mxu0 0.0
  %66 = vmatprep.subr.mxu0 0.0
  %67 = vmatpush1.msra.mxu0 0.0
  %68 = vmatprep.subr.mxu0 0.0
  %69 = vmatpush1.msra.mxu0 0.0
  %70 = vmatprep.subr.mxu0 0.0
  %71 = vmatpush1.msra.mxu0 0.0
  %72 = vmatprep.subr.mxu0 0.0
  %73 = vmatpush1.msra.mxu0 0.0
  %74 = vmatprep.subr.mxu0 0.0
  %75 = vmatpush1.msra.mxu0 0.0
  %76 = vmatprep.subr.mxu0 0.0
  %77 = vmatpush1.msra.mxu0 0.0
  %78 = vmatprep.subr.mxu0 0.0
  %79 = vmatpush1.msra.mxu0 0.0
  %80 = vmatprep.subr.mxu0 0.0
  %81 = vmatpush1.msra.mxu0 0.0
  %82 = vmatprep.subr.mxu0 0.0
  %83 = vmatpush1.msra.mxu0 0.0
  %84 = vmatprep.subr.mxu0 0.0
  %85 = vmatpush1.msra.mxu0 0.0
  %86 = vmatprep.subr.mxu0 0.0
  %87 = vmatpush1.msra.mxu0 0.0
  %88 = vmatprep.subr.mxu0 0.0
  %89 = vmatpush1.msra.mxu0 0.0
  %90 = vmatprep.subr.mxu0 0.0
  %91 = vmatpush1.msra.mxu0 0.0
  %92 = vmatprep.subr.mxu0 0.0
  %93 = vmatpush1.msra.mxu0 0.0
  %94 = vmatprep.subr.mxu0 0.0
  %95 = vmatpush1.msra.mxu0 0.0
  %96 = vmatprep.subr.mxu0 0.0
  %97 = vmatpush1.msra.mxu0 0.0
  %98 = vmatprep.subr.mxu0 0.0
  %99 = vmatpush1.msra.mxu0 0.0
  %100 = vmatprep.mubr.f32.mxu0 0.0
  %101 = vmatmul.mubr.f32.gmra.mrb[0].mxu0 %v30
  %v102 = vpop.f32.mrb[0].mxu0
  %v103 = vadd.f32 %v26, %v102
  %v104 = vpop.f32.mrb[0].mxu0
  %105 = vdwg.mxu0
  %vm106 = vcmask 23552
  %107 = vst.msk [vmem:[%s3] sm:$0xff] %vm106, %v103
  // Predicated region
  $region14: #{tpu_custom_call.1} parent=0 // pred_check
    _
  $region15: #{tpu_custom_call.1} parent=0 // pred_check_branch
    %109 = sbr.rel (0) target = $region17
  $region16: #{tpu_custom_call.1} parent=0 // pred_region
    _
  $region17: #{tpu_custom_call.1} parent=0 // pred_fallthru
    _
  // Predicated region
  $region18: #{tpu_custom_call.1} parent=0 // pred_check
    _
  $region19: #{tpu_custom_call.1} parent=0 // pred_check_branch
    %111 = sbr.rel (0) target = $region21
  $region20: #{tpu_custom_call.1} parent=0 // pred_region
    _
  $region21: #{tpu_custom_call.1} parent=0 // pred_fallthru
    _

</llo_original>
